<compile_context>
chip_gen: v5e
topology: v5e:2x2
jax: 0.10.0
libtpu: 0.0.40
codegen_flags: <defaults>
</compile_context>

<pallas_src>
import jax
import jax.numpy as jnp
from jax.experimental import pallas as pl
from jax.experimental.pallas import tpu as pltpu


# ----------------------------------------------------------------------------
# Parameter slab layout (rows of a (SLAB_ROWS, 128) f32 array, 8-row aligned).
# All entries occupy the full 128-lane width (unused lanes are zero).
# ----------------------------------------------------------------------------
ROW_WSA = 0      # rows 0:4    : fused block-diag [Ws | 0 ; 0 | Wa]       (4, 128)
ROW_BSA = 8      # row  8      : [bs | ba]                                (1, 128)
ROW_WQ = 16      # rows 16:144 : Wq  (128, 32) zero-padded to (128, 128)
ROW_BQ = 144     # row  144    : bq  (1, 32)   zero-padded to (1, 128)
ROW_WOT = 152    # row  152    : Wo^T (1, 32)  zero-padded to (1, 128)
ROW_BO = 160     # row  160    : bo  scalar broadcast across all 128 lanes
SLAB_ROWS = 168  # multiple of 8


def critic_kernel(x_ref, a_ref, p_ref, out_ref):
    x = x_ref[...]                                   # (TB, 3)
    a = a_ref[...]                                   # (TB, 1)

    # Layer 1: fused fc_s + fc_a on the VPU (K=4 unrolled broadcast-FMA).
    # h == concat([relu(x@Ws+bs), relu(a@Wa+ba)], axis=1)   shape (TB, 128)
    h = (x[:, 0:1] * p_ref[ROW_WSA + 0:ROW_WSA + 1, :]
         + x[:, 1:2] * p_ref[ROW_WSA + 1:ROW_WSA + 2, :]
         + x[:, 2:3] * p_ref[ROW_WSA + 2:ROW_WSA + 3, :]
         + a[:, 0:1] * p_ref[ROW_WSA + 3:ROW_WSA + 4, :]
         + p_ref[ROW_BSA:ROW_BSA + 1, :])
    h = jnp.maximum(h, 0.0)

    # Layer 2: q = relu(h @ Wq + bq)  -- the single MXU stage.
    # Wq/bq are zero-padded to 128 lanes, so lanes 32:128 of q are relu(0)=0
    # and cost nothing extra on the MXU/VPU (vregs are 128 lanes anyway).
    wq = p_ref[ROW_WQ:ROW_WQ + 128, :]               # (128, 128), lanes 32: = 0
    bq = p_ref[ROW_BQ:ROW_BQ + 1, :]                 # (1, 128),   lanes 32: = 0
    q = jnp.maximum(
        jnp.dot(h, wq, preferred_element_type=jnp.float32) + bq, 0.0)

    # Layer 3: out = q @ Wo + bo  (TB, 1) -- VPU multiply + XLU lane reduction
    # (avoids another dependent MXU push/pop for a K=32, N=1 matmul).
    # Zero-padded lanes of wo_t contribute 0 to the sum.
    wo_t = p_ref[ROW_WOT:ROW_WOT + 1, :]             # (1, 128), lanes 32: = 0
    bo = p_ref[ROW_BO:ROW_BO + 1, 0:1]               # (1, 1)
    out_ref[...] = jnp.sum(q * wo_t, axis=1, keepdims=True) + bo


def critic_forward(x, a, slab, tb=None):
    """Forward pass. `slab` is the pre-packed parameter slab (pack_params)."""
    B = x.shape[0]
    if tb is None:
        tb = B if B <= 1024 else 1024                # big tiles amortize grid overhead
    assert B % tb == 0, "batch must be a multiple of the batch tile"
    grid = (B // tb,)
    return pl.pallas_call(
        critic_kernel,
        out_shape=jax.ShapeDtypeStruct((B, 1), jnp.float32),
        grid=grid,
        in_specs=[
            pl.BlockSpec((tb, 3), lambda i: (i, 0)),            # x tiles
            pl.BlockSpec((tb, 1), lambda i: (i, 0)),            # a tiles
            pl.BlockSpec((SLAB_ROWS, 128), lambda i: (0, 0)),   # params: VMEM-resident
        ],
        out_specs=pl.BlockSpec((tb, 1), lambda i: (i, 0)),
        compiler_params=pltpu.CompilerParams(
            dimension_semantics=("parallel",)),                 # megacore on v7x
    )(x, a, slab)
    # TODO(synk): for tiny inference batches, stack several (x, a) evaluation
    # sets (or twin/target critics) into one call to amortize launch overhead.


def pack_params(params):
    """Pack all weights/biases into one 128-lane f32 slab. Do this ONCE at init."""
    ws, bs, wa, ba, wq, bq, wo, bo = params
    slab = jnp.zeros((SLAB_ROWS, 128), jnp.float32)
    slab = slab.at[ROW_WSA + 0:ROW_WSA + 3, 0:64].set(ws)       # Ws (3,64)
    slab = slab.at[ROW_WSA + 3:ROW_WSA + 4, 64:128].set(wa)     # Wa (1,64)
    slab = slab.at[ROW_BSA, 0:64].set(bs[0])                    # bs
    slab = slab.at[ROW_BSA, 64:128].set(ba[0])                  # ba
    slab = slab.at[ROW_WQ:ROW_WQ + 128, 0:32].set(wq)           # Wq (128,32), rest 0
    slab = slab.at[ROW_BQ, 0:32].set(bq[0])                     # bq, rest 0
    slab = slab.at[ROW_WOT, 0:32].set(wo[:, 0])                 # Wo^T (32,), rest 0
    slab = slab.at[ROW_BO, 0].set(bo[0, 0])                     # bo in lane 0
    return slab


def init_params(key):
    """Deterministic init mimicking PyTorch nn.Linear default U[-1/sqrt(fan_in), +]."""
    def linear(key, fan_in, fan_out):
        kw, kb = jax.random.split(key)
        bound = 1.0 / jnp.sqrt(fan_in)
        w = jax.random.uniform(kw, (fan_in, fan_out), jnp.float32, -bound, bound)
        b = jax.random.uniform(kb, (1, fan_out), jnp.float32, -bound, bound)
        return w, b

    k1, k2, k3, k4 = jax.random.split(key, 4)
    ws, bs = linear(k1, 3, 64)      # fc_s
    wa, ba = linear(k2, 1, 64)      # fc_a
    wq, bq = linear(k3, 128, 32)    # fc_q
    wo, bo = linear(k4, 32, 1)      # fc_out
    return (ws, bs, wa, ba, wq, bq, wo, bo)


def critic_ref(x, a, params):
    """Pure-JAX reference (full f32 precision) for correctness check."""
    ws, bs, wa, ba, wq, bq, wo, bo = params
    hp = jax.lax.Precision.HIGHEST
    h1 = jax.nn.relu(jnp.dot(x, ws, precision=hp) + bs)
    h2 = jax.nn.relu(jnp.dot(a, wa, precision=hp) + ba)
    cat = jnp.concatenate([h1, h2], axis=1)
    q = jax.nn.relu(jnp.dot(cat, wq, precision=hp) + bq)
    return jnp.dot(q, wo, precision=hp) + bo


if __name__ == "__main__":
    key = jax.random.PRNGKey(0)
    kp, kx, ka = jax.random.split(key, 3)

    B = 8
    params = init_params(kp)
    slab = pack_params(params)                      # packed once, reused every call
    x = jax.random.normal(kx, (B, 3), jnp.float32)  # state:  (batch, 3)
    a = jax.random.normal(ka, (B, 1), jnp.float32)  # action: (batch, 1)

    out = jax.block_until_ready(critic_forward(x, a, slab))
    ref = critic_ref(x, a, params)

    assert out.shape == (B, 1)
    assert jnp.allclose(out, ref, atol=1e-4, rtol=1e-4), \
        float(jnp.max(jnp.abs(out - ref)))

    print("KERNEL_OK")
</pallas_src>

<mosaic_0001>
module attributes {stable_mosaic.version = 11 : i64} {
  func.func @critic_kernel(%arg0: i32, %arg1: memref<8x3xf32, #tpu.memory_space<vmem>>, %arg2: memref<8x1xf32, #tpu.memory_space<vmem>>, %arg3: memref<168x128xf32, #tpu.memory_space<vmem>>, %arg4: memref<8x1xf32, #tpu.memory_space<vmem>>) attributes {dimension_semantics = [#tpu.dimension_semantics<parallel>], iteration_bounds = array<i64: 1>, scalar_prefetch = 0 : i64, scratch_operands = 0 : i64, tpu.core_type = #tpu.core_type<tc>, window_params = [{transform_indices = @transform_0, window_bounds = array<i64: 8, 3>}, {transform_indices = @transform_1, window_bounds = array<i64: 8, 1>}, {pipeline_mode = #tpu.pipeline_mode<synchronous>, transform_indices = @transform_2, window_bounds = array<i64: 168, 128>}, {transform_indices = @transform_3, window_bounds = array<i64: 8, 1>}]} {
    %c0 = arith.constant 0 : index
    %c0_0 = arith.constant 0 : index
    %0 = vector.load %arg1[%c0, %c0_0] : memref<8x3xf32, #tpu.memory_space<vmem>>, vector<8x3xf32>
    %c0_1 = arith.constant 0 : index
    %c0_2 = arith.constant 0 : index
    %1 = vector.load %arg2[%c0_1, %c0_2] : memref<8x1xf32, #tpu.memory_space<vmem>>, vector<8x1xf32>
    %2 = vector.extract_strided_slice %0 {offsets = [0, 0], sizes = [8, 1], strides = [1, 1]} : vector<8x3xf32> to vector<8x1xf32>
    %c0_3 = arith.constant 0 : index
    %c0_4 = arith.constant 0 : index
    %3 = vector.load %arg3[%c0_3, %c0_4] : memref<168x128xf32, #tpu.memory_space<vmem>>, vector<1x128xf32>
    %4 = vector.broadcast %2 : vector<8x1xf32> to vector<8x128xf32>
    %5 = vector.broadcast %3 : vector<1x128xf32> to vector<8x128xf32>
    %6 = arith.mulf %4, %5 : vector<8x128xf32>
    %7 = vector.extract_strided_slice %0 {offsets = [0, 1], sizes = [8, 1], strides = [1, 1]} : vector<8x3xf32> to vector<8x1xf32>
    %c1 = arith.constant 1 : index
    %c0_5 = arith.constant 0 : index
    %8 = vector.load %arg3[%c1, %c0_5] : memref<168x128xf32, #tpu.memory_space<vmem>>, vector<1x128xf32>
    %9 = vector.broadcast %7 : vector<8x1xf32> to vector<8x128xf32>
    %10 = vector.broadcast %8 : vector<1x128xf32> to vector<8x128xf32>
    %11 = arith.mulf %9, %10 : vector<8x128xf32>
    %12 = arith.addf %6, %11 : vector<8x128xf32>
    %13 = vector.extract_strided_slice %0 {offsets = [0, 2], sizes = [8, 1], strides = [1, 1]} : vector<8x3xf32> to vector<8x1xf32>
    %c2 = arith.constant 2 : index
    %c0_6 = arith.constant 0 : index
    %14 = vector.load %arg3[%c2, %c0_6] : memref<168x128xf32, #tpu.memory_space<vmem>>, vector<1x128xf32>
    %15 = vector.broadcast %13 : vector<8x1xf32> to vector<8x128xf32>
    %16 = vector.broadcast %14 : vector<1x128xf32> to vector<8x128xf32>
    %17 = arith.mulf %15, %16 : vector<8x128xf32>
    %18 = arith.addf %12, %17 : vector<8x128xf32>
    %c3 = arith.constant 3 : index
    %c0_7 = arith.constant 0 : index
    %19 = vector.load %arg3[%c3, %c0_7] : memref<168x128xf32, #tpu.memory_space<vmem>>, vector<1x128xf32>
    %20 = vector.broadcast %1 : vector<8x1xf32> to vector<8x128xf32>
    %21 = vector.broadcast %19 : vector<1x128xf32> to vector<8x128xf32>
    %22 = arith.mulf %20, %21 : vector<8x128xf32>
    %23 = arith.addf %18, %22 : vector<8x128xf32>
    %c8 = arith.constant 8 : index
    %c0_8 = arith.constant 0 : index
    %24 = vector.load %arg3[%c8, %c0_8] : memref<168x128xf32, #tpu.memory_space<vmem>>, vector<1x128xf32>
    %25 = vector.broadcast %24 : vector<1x128xf32> to vector<8x128xf32>
    %26 = arith.addf %23, %25 : vector<8x128xf32>
    %cst = arith.constant 0.000000e+00 : f32
    %27 = vector.broadcast %cst : f32 to vector<8x128xf32>
    %28 = arith.maximumf %26, %27 : vector<8x128xf32>
    %c16 = arith.constant 16 : index
    %c0_9 = arith.constant 0 : index
    %29 = vector.load %arg3[%c16, %c0_9] : memref<168x128xf32, #tpu.memory_space<vmem>>, vector<128x128xf32>
    %c144 = arith.constant 144 : index
    %c0_10 = arith.constant 0 : index
    %30 = vector.load %arg3[%c144, %c0_10] : memref<168x128xf32, #tpu.memory_space<vmem>>, vector<1x128xf32>
    %cst_11 = arith.constant dense<0.000000e+00> : vector<8x128xf32>
    %31 = tpu.matmul %28, %29, %cst_11 {dimension_numbers = #tpu.dot_dimension_numbers<[1], [0], [0], [1], [0, 0, 1, 1], [], []>} : vector<8x128xf32>, vector<128x128xf32>, vector<8x128xf32> -> vector<8x128xf32>
    %32 = vector.broadcast %30 : vector<1x128xf32> to vector<8x128xf32>
    %33 = arith.addf %31, %32 : vector<8x128xf32>
    %cst_12 = arith.constant 0.000000e+00 : f32
    %34 = vector.broadcast %cst_12 : f32 to vector<8x128xf32>
    %35 = arith.maximumf %33, %34 : vector<8x128xf32>
    %c152 = arith.constant 152 : index
    %c0_13 = arith.constant 0 : index
    %36 = vector.load %arg3[%c152, %c0_13] : memref<168x128xf32, #tpu.memory_space<vmem>>, vector<1x128xf32>
    %c160 = arith.constant 160 : index
    %c0_14 = arith.constant 0 : index
    %37 = vector.load %arg3[%c160, %c0_14] : memref<168x128xf32, #tpu.memory_space<vmem>>, vector<1x1xf32>
    %38 = vector.broadcast %36 : vector<1x128xf32> to vector<8x128xf32>
    %39 = arith.mulf %35, %38 : vector<8x128xf32>
    %cst_15 = arith.constant dense<0.000000e+00> : vector<8xf32>
    %40 = vector.multi_reduction <add>, %39, %cst_15 [1] : vector<8x128xf32> to vector<8xf32>
    %41 = vector.shape_cast %40 : vector<8xf32> to vector<8x1xf32>
    %42 = vector.broadcast %37 : vector<1x1xf32> to vector<8x1xf32>
    %43 = arith.addf %41, %42 : vector<8x1xf32>
    %c0_16 = arith.constant 0 : index
    %c0_17 = arith.constant 0 : index
    %44 = vector.load %arg4[%c0_16, %c0_17] : memref<8x1xf32, #tpu.memory_space<vmem>>, vector<8x1xf32>
    tpu.vector_store %arg4[%c0_16, %c0_17], %43 {strides = array<i32>} : memref<8x1xf32, #tpu.memory_space<vmem>>, vector<8x1xf32>,
    return
  }
  func.func @transform_0(%arg0: i32) -> (i32, i32) {
    %c0_i32 = arith.constant 0 : i32
    %c0_i32_0 = arith.constant 0 : i32
    return %arg0, %c0_i32 : i32, i32
  }
  func.func @transform_1(%arg0: i32) -> (i32, i32) {
    %c0_i32 = arith.constant 0 : i32
    %c0_i32_0 = arith.constant 0 : i32
    return %arg0, %c0_i32 : i32, i32
  }
  func.func @transform_2(%arg0: i32) -> (i32, i32) {
    %c0_i32 = arith.constant 0 : i32
    %c0_i32_0 = arith.constant 0 : i32
    %c0_i32_1 = arith.constant 0 : i32
    return %c0_i32, %c0_i32_0 : i32, i32
  }
  func.func @transform_3(%arg0: i32) -> (i32, i32) {
    %c0_i32 = arith.constant 0 : i32
    %c0_i32_0 = arith.constant 0 : i32
    return %arg0, %c0_i32 : i32, i32
  }
}

</mosaic_0001>

<llo_original>
// kernel: tpu_custom_call.1
$region0: #{tpu_custom_call.1}
  #allocation0 [shape = 'u32[]', space=smem, size = 0x4, offset = 0x4, fixed_abs, tag = 'smem constant byte address 0x4 - core index']
  #allocation1 [shape = 'u32[72,128]{1,0:T(1,128)}', space=vmem, size = 0x9000, scoped, tag = 'internal scratch']
  %s0 = inlined_call_operand.vmem [shape: f32[8,3], index: 0, kind: input, shape index: {}]
  %s1 = inlined_call_operand.vmem [shape: f32[8,1], index: 1, kind: input, shape index: {}]
  %s2 = inlined_call_operand.hbm [shape: f32[168,128], index: 2, kind: input, shape index: {}]
  %s3 = inlined_call_operand.vmem [shape: f32[8,1], index: 3, kind: output, shape index: {}]
  %s4 = sld [smem:[#allocation0]]
  $region26: #{tpu_custom_call.1} parent=0
    _
  %s6 = ssub.s32 1, %s4
  %s7 = scalar_select 0, %s6, %s4
  $region1: #{tpu_custom_call.1} parent=0
    #allocation2 [shape = 'u8[86016]{0}', space=vmem, size = 0x15000, scoped, tag = 'input window, operand 2, single buffered']
    #allocation3 [shape = 's32[1]{0}', space=sflag, size = 0x4, scoped, tag = 'scoped memory for tpu_custom_call.1']
    %8 = vsyncpa [#allocation3], 0
    // Predicated region
    $region2: #{tpu_custom_call.1} parent=1 // pred_check
      _
    $region3: #{tpu_custom_call.1} parent=1 // pred_check_branch
      %10 = sbr.rel (0) target = $region5
    $region4: #{tpu_custom_call.1} parent=1 // pred_region
      _
    $region5: #{tpu_custom_call.1} parent=1 // pred_fallthru
      _
    // Predicated region
    $region6: #{tpu_custom_call.1} parent=1 // pred_check
      _
    $region7: #{tpu_custom_call.1} parent=1 // pred_check_branch
      %12 = sbr.rel (0) target = $region9
    $region8: #{tpu_custom_call.1} parent=1 // pred_region
      _
    $region9: #{tpu_custom_call.1} parent=1 // pred_fallthru
      _
    // Predicated region
    $region10: #{tpu_custom_call.1} parent=1 // pred_check
      _
    $region11: #{tpu_custom_call.1} parent=1 // pred_check_branch
      %14 = sbr.rel (0) target = $region13
    $region12: #{tpu_custom_call.1} parent=1 // pred_region
      %16 = vsyncadd [#allocation3], 0
      %s17 = sshll.u32 %s2, 4
      %s18 = int_to_ptr.hbm [resolvable:$true] %s17
      %s19 = sshll.u32 [#allocation2], 4
      %s20 = int_to_ptr.vmem [resolvable:$true] %s19
      %25 = dma.hbm_to_vmem [thread:$0]  %s18, 2688, %s20, [#allocation3], 128, 128, 8
    $region13: #{tpu_custom_call.1} parent=1 // pred_fallthru
      _
    // Predicated region
    $region14: #{tpu_custom_call.1} parent=1 // pred_check
      _
    $region15: #{tpu_custom_call.1} parent=1 // pred_check_branch
      %27 = sbr.rel (0) target = $region17
    $region16: #{tpu_custom_call.1} parent=1 // pred_region
      %29 = dma.done [#allocation3], 2688
    $region17: #{tpu_custom_call.1} parent=1 // pred_fallthru
      _
    %v30 = vld [vmem:[%s0] sm:$0xff]
    %v31 = vld [vmem:[%s1] sm:$0xff]
    %v32 = vld [vmem:[#allocation2] sm:$0x1]
    %34 = vset.pattern.permute.xlu0 0
    %35 = vperm.xlu0 %34, %v30
    %v36 = vpop.permute.xlu0 %35
    %v38 = vperm.slane %v32, 0
    %v39 = vmul.f32 %v36, %v38
    %v40 = vld [vmem:[#allocation2 + $0x1] sm:$0x1]
    %41 = vset.pattern.permute.xlu0 1
    %42 = vperm.xlu0 %41, %v30
    %v43 = vpop.permute.xlu0 %42
    %v45 = vperm.slane %v40, 0
    %v46 = vmul.f32 %v43, %v45
    %v47 = vadd.f32 %v39, %v46
    %v48 = vld [vmem:[#allocation2 + $0x2] sm:$0x1]
    %49 = vset.pattern.permute.xlu0 2
    %50 = vperm.xlu0 %49, %v30
    %v51 = vpop.permute.xlu0 %50
    %v53 = vperm.slane %v48, 0
    %v54 = vmul.f32 %v51, %v53
    %v55 = vadd.f32 %v47, %v54
    %v56 = vld [vmem:[#allocation2 + $0x3] sm:$0x1]
    %58 = vset.pattern.permute.xlu0 0
    %59 = vperm.xlu0 %58, %v31
    %v60 = vpop.permute.xlu0 %59
    %v62 = vperm.slane %v56, 0
    %v63 = vmul.f32 %v60, %v62
    %v64 = vadd.f32 %v55, %v63
    %v65 = vld [vmem:[#allocation2 + $0x8] sm:$0x1]
    %v66 = vperm.slane %v65, 0
    %v67 = vadd.f32 %v64, %v66
    %v68 = vmax.f32 %v67, 0.0
    %v69 = vld [vmem:[#allocation2 + $0x10] sm:$0xff]
    %v70 = vld [vmem:[#allocation2 + $0x18] sm:$0xff]
    %v71 = vld [vmem:[#allocation2 + $0x20] sm:$0xff]
    %v72 = vld [vmem:[#allocation2 + $0x28] sm:$0xff]
    %v73 = vld [vmem:[#allocation2 + $0x30] sm:$0xff]
    %v74 = vld [vmem:[#allocation2 + $0x38] sm:$0xff]
    %v75 = vld [vmem:[#allocation2 + $0x40] sm:$0xff]
    %v76 = vld [vmem:[#allocation2 + $0x48] sm:$0xff]
    %v77 = vld [vmem:[#allocation2 + $0x50] sm:$0xff]
    %v78 = vld [vmem:[#allocation2 + $0x58] sm:$0xff]
    %v79 = vld [vmem:[#allocation2 + $0x60] sm:$0xff]
    %v80 = vld [vmem:[#allocation2 + $0x68] sm:$0xff]
    %v81 = vld [vmem:[#allocation2 + $0x70] sm:$0xff]
    %v82 = vld [vmem:[#allocation2 + $0x78] sm:$0xff]
    %v83 = vld [vmem:[#allocation2 + $0x80] sm:$0xff]
    %v84 = vld [vmem:[#allocation2 + $0x88] sm:$0xff]
    %v85 = vld [vmem:[#allocation2 + $0x90] sm:$0x1]
    %v86 = vperm.slane %v85, 0
    %87 = vmatpush.msra.mxu0 %v84
    %88 = vmatpush.msra.mxu0 %v83
    %89 = vmatpush.msra.mxu0 %v82
    %90 = vmatpush.msra.mxu0 %v81
    %91 = vmatpush.msra.mxu0 %v80
    %92 = vmatpush.msra.mxu0 %v79
    %93 = vmatpush.msra.mxu0 %v78
    %94 = vmatpush.msra.mxu0 %v77
    %95 = vmatpush.msra.mxu0 %v76
    %96 = vmatpush.msra.mxu0 %v75
    %97 = vmatpush.msra.mxu0 %v74
    %98 = vmatpush.msra.mxu0 %v73
    %99 = vmatpush.msra.mxu0 %v72
    %100 = vmatpush.msra.mxu0 %v71
    %101 = vmatpush.msra.mxu0 %v70
    %102 = vmatpush.msra.mxu0 %v69
    %103 = vmatmul.f32.gmra.mxu0 %v68
    %v104 = vpop.f32.mrf.mxu0
    %v105 = vadd.f32 %v86, %v104
    %106 = vdwg.mxu0
    %v107 = vmax.f32 %v105, 0.0
    %v108 = vld [vmem:[#allocation2 + $0x98] sm:$0x1]
    %v109 = vld [vmem:[#allocation2 + $0xa0] sm:$0x1]
    %v110 = vperm.slane %v108, 0
    %v111 = vmul.f32 %v107, %v110
    %112 = vadd.xlane.f32.xlu0 %v111
    %v113 = vpop.xlane.xlu0 %112
    %v114 = vperm.slane %v109, 0
    %v115 = vadd.f32 %v113, %v114
    %vm116 = vcmask 7168
    %117 = vst.msk [vmem:[%s3] sm:$0xff] %vm116, %v115
    // Predicated region
    $region18: #{tpu_custom_call.1} parent=1 // pred_check
      _
    $region19: #{tpu_custom_call.1} parent=1 // pred_check_branch
      %119 = sbr.rel (0) target = $region21
    $region20: #{tpu_custom_call.1} parent=1 // pred_region
      _
    $region21: #{tpu_custom_call.1} parent=1 // pred_fallthru
      _
    // Predicated region
    $region22: #{tpu_custom_call.1} parent=1 // pred_check
      _
    $region23: #{tpu_custom_call.1} parent=1 // pred_check_branch
      %121 = sbr.rel (0) target = $region25
    $region24: #{tpu_custom_call.1} parent=1 // pred_region
      _
    $region25: #{tpu_custom_call.1} parent=1 // pred_fallthru
      _
    %122 = vsyncpa [#allocation3], 1

</llo_original>
